<compile_context>
chip_gen: v5e
topology: v5e:2x2
jax: 0.10.0
libtpu: 0.0.40
codegen_flags: <defaults>
</compile_context>

<pallas_src>
import functools
import math

import numpy as np
import jax
import jax.numpy as jnp
from jax.experimental import pallas as pl
from jax.experimental.pallas import tpu as pltpu

_VMEM_LIMIT = 32 * 1024 * 1024  # safe on v5e (128M), v6e (128M), v7x (64M phys)


# ----------------------------------------------------------------------------
# Pallas kernels
# ----------------------------------------------------------------------------

def _mm_bn_kernel(a_ref, w_ref, s_ref, b_ref, o_ref, *, relu):
    # (tm, K) @ (K, N) on the MXU (bf16 in, f32 accumulate) + fused scale/bias.
    acc = jnp.dot(a_ref[...], w_ref[...], preferred_element_type=jnp.float32)
    y = acc * s_ref[...] + b_ref[...]
    if relu:
        y = jnp.maximum(y, 0.0)
    o_ref[...] = y


def _grouped_mm_bn_kernel(a_ref, w_ref, s_ref, b_ref, o_ref, *, relu, groups):
    # a: (G, tm, Kpg), w: (G, Kpg, Npg) -> lane-dense (tm, G*Npg) output block.
    parts = []
    for g in range(groups):
        parts.append(jnp.dot(a_ref[g], w_ref[g],
                             preferred_element_type=jnp.float32))
    y = jnp.concatenate(parts, axis=-1)
    y = y * s_ref[...] + b_ref[...]
    if relu:
        y = jnp.maximum(y, 0.0)
    o_ref[...] = y


def _maxpool_kernel(x_ref, o_ref):
    # x: (9, tm, C) -> (tm, C) max over the 9 window taps.
    o_ref[...] = jnp.max(x_ref[...], axis=0)


def _avgpool_kernel(x_ref, o_ref):
    # x: (1, HW, C) per image -> (1, C) global average pool.
    o_ref[...] = jnp.mean(x_ref[0], axis=0, keepdims=True)


def _se_excite_kernel(p_ref, w1_ref, b1_ref, w2_ref, b2_ref, o_ref):
    # Batched SE excitation: pooled (N, C) -> channel scales (N, C).
    z = jnp.maximum(
        jnp.dot(p_ref[...], w1_ref[...],
                preferred_element_type=jnp.float32) + b1_ref[...], 0.0)
    o_ref[...] = jax.nn.sigmoid(
        jnp.dot(z, w2_ref[...],
                preferred_element_type=jnp.float32) + b2_ref[...])


def _se_res_kernel(x_ref, s_ref, r_ref, o_ref):
    # Fused SE rescale + residual add + ReLU for one image.
    o_ref[0] = jnp.maximum(x_ref[0] * s_ref[...] + r_ref[0], 0.0)


def _gru2_fc_kernel(gx1_ref, whh1_ref, bhh1_ref, wih2_ref, bih2_ref,
                    whh2_ref, bhh2_ref, wfc_ref, bfc_ref, o_ref,
                    h1_ref, h2_ref):
    # Grid over time steps ("arbitrary"); both hidden states live in VMEM
    # scratch.  gx1 already contains x_t @ W_ih1^T + b_ih1.  Gate order [r|z|n].
    t = pl.program_id(0)

    @pl.when(t == 0)
    def _():
        h1_ref[...] = jnp.zeros_like(h1_ref)
        h2_ref[...] = jnp.zeros_like(h2_ref)

    H = h1_ref.shape[1]

    def cell(gx, h, whh, bhh):
        gh = jnp.dot(h, whh, preferred_element_type=jnp.float32) + bhh
        r = jax.nn.sigmoid(gx[:, 0:H] + gh[:, 0:H])
        z = jax.nn.sigmoid(gx[:, H:2 * H] + gh[:, H:2 * H])
        n = jnp.tanh(gx[:, 2 * H:] + r * gh[:, 2 * H:])
        return (1.0 - z) * n + z * h

    h1 = cell(gx1_ref[0], h1_ref[...], whh1_ref[...], bhh1_ref[...])
    h1_ref[...] = h1
    gx2 = (jnp.dot(h1, wih2_ref[...], preferred_element_type=jnp.float32)
           + bih2_ref[...])
    h2 = cell(gx2, h2_ref[...], whh2_ref[...], bhh2_ref[...])
    h2_ref[...] = h2
    # Final FC fused into the time loop.
    o_ref[0] = (jnp.dot(h2, wfc_ref[...], preferred_element_type=jnp.float32)
                + bfc_ref[...])


# ----------------------------------------------------------------------------
# Wrappers (glue: reshapes / im2col / padding; compute stays in Pallas)
# ----------------------------------------------------------------------------

def fold_bn(bn, eps=1e-5):
    scale = bn['gamma'] / jnp.sqrt(bn['var'] + eps)
    bias = bn['beta'] - bn['mean'] * scale
    return scale, bias


def matmul_bn(a, w, scale, bias, relu, tm=512):
    """(M, K) @ (K, N) with fused scale/bias(+ReLU); tiled over M, bf16 MXU."""
    M, K = a.shape
    N = w.shape[1]
    tm = min(tm, M)
    a = a.astype(jnp.bfloat16)
    w = w.astype(jnp.bfloat16)
    return pl.pallas_call(
        functools.partial(_mm_bn_kernel, relu=relu),
        out_shape=jax.ShapeDtypeStruct((M, N), jnp.float32),
        grid=(pl.cdiv(M, tm),),
        in_specs=[pl.BlockSpec((tm, K), lambda i: (i, 0)),
                  pl.BlockSpec((K, N), lambda i: (0, 0)),
                  pl.BlockSpec((1, N), lambda i: (0, 0)),
                  pl.BlockSpec((1, N), lambda i: (0, 0))],
        out_specs=pl.BlockSpec((tm, N), lambda i: (i, 0)),
        compiler_params=pltpu.CompilerParams(
            dimension_semantics=("parallel",),
            vmem_limit_bytes=_VMEM_LIMIT),
    )(a, w, scale.reshape(1, N).astype(jnp.float32),
      bias.reshape(1, N).astype(jnp.float32))


def grouped_matmul_bn(a, w, scale, bias, relu, tm=512):
    """a: (G, M, Kpg), w: (G, Kpg, Npg) -> lane-dense (M, G*Npg), fused BN."""
    G, M, Kpg = a.shape
    Npg = w.shape[2]
    Cout = G * Npg
    tm = min(tm, M)
    a = a.astype(jnp.bfloat16)
    w = w.astype(jnp.bfloat16)
    return pl.pallas_call(
        functools.partial(_grouped_mm_bn_kernel, relu=relu, groups=G),
        out_shape=jax.ShapeDtypeStruct((M, Cout), jnp.float32),
        grid=(pl.cdiv(M, tm),),
        in_specs=[pl.BlockSpec((G, tm, Kpg), lambda i: (0, i, 0)),
                  pl.BlockSpec((G, Kpg, Npg), lambda i: (0, 0, 0)),
                  pl.BlockSpec((1, Cout), lambda i: (0, 0)),
                  pl.BlockSpec((1, Cout), lambda i: (0, 0))],
        out_specs=pl.BlockSpec((tm, Cout), lambda i: (i, 0)),
        compiler_params=pltpu.CompilerParams(
            dimension_semantics=("parallel",),
            vmem_limit_bytes=_VMEM_LIMIT),
    )(a, w, scale.reshape(1, Cout).astype(jnp.float32),
      bias.reshape(1, Cout).astype(jnp.float32))


def im2col(x, kh, kw, stride, padding):
    """NHWC -> (M, kh*kw, Cin) patches (JAX glue).  K ordered (tap, cin)."""
    N, H, W, C = x.shape
    Ho = (H + 2 * padding - kh) // stride + 1
    Wo = (W + 2 * padding - kw) // stride + 1
    xp = jnp.pad(x, ((0, 0), (padding, padding), (padding, padding), (0, 0)))
    cols = [xp[:, i:i + stride * (Ho - 1) + 1:stride,
               j:j + stride * (Wo - 1) + 1:stride, :]
            for i in range(kh) for j in range(kw)]
    patches = jnp.stack(cols, axis=3)            # (N, Ho, Wo, T, C)
    return patches.reshape(N * Ho * Wo, kh * kw, C), Ho, Wo


def conv1x1_bn(x, w, bn, relu, stride=1):
    """1x1 conv (groups=1) + fused BN(+ReLU).  No im2col needed."""
    Cout = w.shape[-1]
    if stride > 1:
        x = x[:, ::stride, ::stride, :]
    N, Ho, Wo, Cin = x.shape
    scale, bias = fold_bn(bn)
    out = matmul_bn(x.reshape(N * Ho * Wo, Cin), w.reshape(Cin, Cout),
                    scale, bias, relu)
    return out.reshape(N, Ho, Wo, Cout)


def conv_bn(x, w, bn, relu, stride=1, padding=0):
    """Dense (groups=1) kxk conv via im2col + fused BN(+ReLU)."""
    kh, kw, Cin, Cout = w.shape
    N = x.shape[0]
    patches, Ho, Wo = im2col(x, kh, kw, stride, padding)
    K = kh * kw * Cin
    scale, bias = fold_bn(bn)
    out = matmul_bn(patches.reshape(-1, K), w.reshape(K, Cout),
                    scale, bias, relu)
    return out.reshape(N, Ho, Wo, Cout)


def grouped_conv_bn(x, w, bn, relu, stride, padding, groups):
    """Grouped kxk conv via per-group im2col + fused BN(+ReLU)."""
    kh, kw, cpg, Cout = w.shape
    N = x.shape[0]
    patches, Ho, Wo = im2col(x, kh, kw, stride, padding)   # (M, T, Cin)
    M = N * Ho * Wo
    T = kh * kw
    Npg = Cout // groups
    pg = (patches.reshape(M, T, groups, cpg)
          .transpose(2, 0, 1, 3).reshape(groups, M, T * cpg))
    wg = (w.reshape(T, cpg, groups, Npg)
          .transpose(2, 0, 1, 3).reshape(groups, T * cpg, Npg))
    scale, bias = fold_bn(bn)
    out = grouped_matmul_bn(pg, wg, scale, bias, relu)
    return out.reshape(N, Ho, Wo, Cout)


def maxpool_3x3_s2_ceil(x):
    """nn.MaxPool2d(3, stride=2, ceil_mode=True), row-tiled 9-tap reduce."""
    N, H, W, C = x.shape
    Ho = math.ceil((H - 3) / 2) + 1
    Wo = math.ceil((W - 3) / 2) + 1
    pad_h = (Ho - 1) * 2 + 3 - H
    pad_w = (Wo - 1) * 2 + 3 - W
    xp = jnp.pad(x, ((0, 0), (0, pad_h), (0, pad_w), (0, 0)),
                 constant_values=float('-inf'))
    cols = [xp[:, i:i + 2 * (Ho - 1) + 1:2, j:j + 2 * (Wo - 1) + 1:2, :]
            for i in range(3) for j in range(3)]
    M = N * Ho * Wo
    stack = jnp.stack(cols, axis=0).reshape(9, M, C)
    tm = min(512, M)
    out = pl.pallas_call(
        _maxpool_kernel,
        out_shape=jax.ShapeDtypeStruct((M, C), jnp.float32),
        grid=(pl.cdiv(M, tm),),
        in_specs=[pl.BlockSpec((9, tm, C), lambda i: (0, i, 0))],
        out_specs=pl.BlockSpec((tm, C), lambda i: (i, 0)),
        compiler_params=pltpu.CompilerParams(
            dimension_semantics=("parallel",),
            vmem_limit_bytes=_VMEM_LIMIT),
    )(stack)
    return out.reshape(N, Ho, Wo, C)


def avg_pool_images(x):
    """AdaptiveAvgPool2d((1,1)) + flatten -> (N, C), grid over images."""
    N, H, W, C = x.shape
    HW = H * W
    return pl.pallas_call(
        _avgpool_kernel,
        out_shape=jax.ShapeDtypeStruct((N, C), jnp.float32),
        grid=(N,),
        in_specs=[pl.BlockSpec((1, HW, C), lambda n: (n, 0, 0))],
        out_specs=pl.BlockSpec((1, C), lambda n: (n, 0)),
        compiler_params=pltpu.CompilerParams(
            dimension_semantics=("parallel",),
            vmem_limit_bytes=_VMEM_LIMIT),
    )(x.reshape(N, HW, C))


def se_excite(pooled, w1, b1, w2, b2):
    """Batched SE excitation: (N,C) -> per-image channel scales (N,C)."""
    N, C = pooled.shape
    Cr = w1.shape[1]
    return pl.pallas_call(
        _se_excite_kernel,
        out_shape=jax.ShapeDtypeStruct((N, C), jnp.float32),
    )(pooled, w1, b1.reshape(1, Cr), w2, b2.reshape(1, C))


def se_scale_add_relu(x, s, residual):
    """Fused SE rescale + residual add + ReLU, grid over images."""
    N, H, W, C = x.shape
    HW = H * W
    y = pl.pallas_call(
        _se_res_kernel,
        out_shape=jax.ShapeDtypeStruct((N, HW, C), jnp.float32),
        grid=(N,),
        in_specs=[pl.BlockSpec((1, HW, C), lambda n: (n, 0, 0)),
                  pl.BlockSpec((1, C), lambda n: (n, 0)),
                  pl.BlockSpec((1, HW, C), lambda n: (n, 0, 0))],
        out_specs=pl.BlockSpec((1, HW, C), lambda n: (n, 0, 0)),
        compiler_params=pltpu.CompilerParams(
            dimension_semantics=("parallel",),
            vmem_limit_bytes=_VMEM_LIMIT),
    )(x.reshape(N, HW, C), s, residual.reshape(N, HW, C))
    return y.reshape(N, H, W, C)


def gru2_fc(x, g1, g2, fc_w, fc_b):
    """Two stacked batch_first GRUs (zero init hidden) + final FC, fused."""
    B, S, Din = x.shape
    H = g1['whh'].shape[0]
    NC = fc_w.shape[1]
    # Precompute layer-1 input projection for all steps (tiled matmul kernel).
    gx1 = matmul_bn(x.reshape(B * S, Din), g1['wih'],
                    jnp.ones((3 * H,), jnp.float32), g1['bih'], relu=False)
    gx1 = gx1.reshape(B, S, 3 * H).transpose(1, 0, 2)        # (S, B, 3H)
    # TODO(synk): pad H / 3H to lane multiples of 128 for full MXU width.
    out_t = pl.pallas_call(
        _gru2_fc_kernel,
        out_shape=jax.ShapeDtypeStruct((S, B, NC), jnp.float32),
        grid=(S,),
        in_specs=[pl.BlockSpec((1, B, 3 * H), lambda t: (t, 0, 0)),
                  pl.BlockSpec((H, 3 * H), lambda t: (0, 0)),
                  pl.BlockSpec((1, 3 * H), lambda t: (0, 0)),
                  pl.BlockSpec((H, 3 * H), lambda t: (0, 0)),
                  pl.BlockSpec((1, 3 * H), lambda t: (0, 0)),
                  pl.BlockSpec((H, 3 * H), lambda t: (0, 0)),
                  pl.BlockSpec((1, 3 * H), lambda t: (0, 0)),
                  pl.BlockSpec((H, NC), lambda t: (0, 0)),
                  pl.BlockSpec((1, NC), lambda t: (0, 0))],
        out_specs=pl.BlockSpec((1, B, NC), lambda t: (t, 0, 0)),
        scratch_shapes=[pltpu.VMEM((B, H), jnp.float32),
                        pltpu.VMEM((B, H), jnp.float32)],
        compiler_params=pltpu.CompilerParams(
            dimension_semantics=("arbitrary",),
            vmem_limit_bytes=_VMEM_LIMIT),
    )(gx1, g1['whh'], g1['bhh'].reshape(1, 3 * H),
      g2['wih'], g2['bih'].reshape(1, 3 * H),
      g2['whh'], g2['bhh'].reshape(1, 3 * H),
      fc_w, fc_b.reshape(1, NC))
    return out_t.transpose(1, 0, 2).reshape(B * S, NC)


# ----------------------------------------------------------------------------
# Model definition (parameters + forward)
# ----------------------------------------------------------------------------

class KeyGen:
    def __init__(self, seed):
        self._key = jax.random.PRNGKey(seed)

    def __call__(self):
        self._key, k = jax.random.split(self._key)
        return k


def conv_w(kg, kh, kw, cin_pg, cout):
    fan_in = kh * kw * cin_pg
    return (jax.random.normal(kg(), (kh, kw, cin_pg, cout), jnp.float32)
            * np.float32(np.sqrt(2.0 / fan_in)))


def bn_p(kg, c):
    return dict(
        gamma=jax.random.uniform(kg(), (c,), jnp.float32, 0.5, 1.5),
        beta=jax.random.normal(kg(), (c,), jnp.float32) * 0.1,
        mean=jax.random.normal(kg(), (c,), jnp.float32) * 0.1,
        var=jax.random.uniform(kg(), (c,), jnp.float32, 0.5, 1.5),
    )


def lin_p(kg, din, dout):
    bound = 1.0 / np.sqrt(din)
    return (jax.random.uniform(kg(), (din, dout), jnp.float32, -bound, bound),
            jax.random.uniform(kg(), (dout,), jnp.float32, -bound, bound))


def block_p(kg, inplanes, width, out_ch, groups, reduction, stride):
    p = dict(
        conv1=conv_w(kg, 1, 1, inplanes, width),
        bn1=bn_p(kg, width),
        conv2=conv_w(kg, 3, 3, width // groups, width),
        bn2=bn_p(kg, width),
        conv3=conv_w(kg, 1, 1, width, out_ch),
        bn3=bn_p(kg, out_ch),
        se_w1=lin_p(kg, out_ch, out_ch // reduction),
        se_w2=lin_p(kg, out_ch // reduction, out_ch),
        stride=stride, groups=groups,
    )
    if stride != 1 or inplanes != out_ch:
        p['down_conv'] = conv_w(kg, 1, 1, inplanes, out_ch)
        p['down_bn'] = bn_p(kg, out_ch)
    return p


def gru_p(kg, din, h):
    bound = 1.0 / np.sqrt(h)
    return dict(
        wih=jax.random.uniform(kg(), (din, 3 * h), jnp.float32, -bound, bound),
        whh=jax.random.uniform(kg(), (h, 3 * h), jnp.float32, -bound, bound),
        bih=jax.random.uniform(kg(), (3 * h,), jnp.float32, -bound, bound),
        bhh=jax.random.uniform(kg(), (3 * h,), jnp.float32, -bound, bound),
    )


def build_params(kg, cfg):
    params = dict(
        stem_conv=conv_w(kg, 7, 7, 3, cfg['stem']),
        stem_bn=bn_p(kg, cfg['stem']),
        stages=[],
    )
    inplanes = cfg['stem']
    for (nblocks, width, out_ch, stride) in cfg['stages']:
        blocks = []
        for i in range(nblocks):
            blocks.append(block_p(kg, inplanes, width, out_ch, cfg['groups'],
                                  cfg['reduction'],
                                  stride if i == 0 else 1))
            inplanes = out_ch
        params['stages'].append(blocks)
    params['feat_dim'] = inplanes
    params['gru1'] = gru_p(kg, inplanes, cfg['hidden'])
    params['gru2'] = gru_p(kg, cfg['hidden'], cfg['hidden'])
    params['fc'] = lin_p(kg, cfg['hidden'], cfg['num_classes'])
    return params


def se_bottleneck(x, p):
    stride, groups = p['stride'], p['groups']
    out = conv1x1_bn(x, p['conv1'], p['bn1'], relu=True)
    out = grouped_conv_bn(out, p['conv2'], p['bn2'], relu=True,
                          stride=stride, padding=1, groups=groups)
    out = conv1x1_bn(out, p['conv3'], p['bn3'], relu=False)
    if 'down_conv' in p:
        residual = conv1x1_bn(x, p['down_conv'], p['down_bn'],
                              relu=False, stride=stride)
    else:
        residual = x
    w1, b1 = p['se_w1']
    w2, b2 = p['se_w2']
    pooled = avg_pool_images(out)                 # (N, C)
    s = se_excite(pooled, w1, b1, w2, b2)         # (N, C) channel scales
    return se_scale_add_relu(out, s, residual)    # SE * out + residual, ReLU


def encode(imgs_nhwc, params):
    # layer0: conv7x7/s2 + BN + ReLU (fused) + maxpool3x3/s2(ceil)
    x = conv_bn(imgs_nhwc, params['stem_conv'], params['stem_bn'],
                relu=True, stride=2, padding=3)
    x = maxpool_3x3_s2_ceil(x)
    # layer1..layer4
    for blocks in params['stages']:
        for p in blocks:
            x = se_bottleneck(x, p)
    feats = avg_pool_images(x)                    # avg_pool + view(N, -1)
    # TODO(synk): nn.Dropout(p=0.5) is identity at inference; training-mode
    # dropout RNG not implemented.
    return feats


def forward(x_bschw, params):
    b, s, c, h, w = x_bschw.shape
    imgs = x_bschw.reshape(b * s, c, h, w).transpose(0, 2, 3, 1)  # NCHW -> NHWC
    feats = encode(imgs, params)                                  # (b*s, feat)
    seq = feats.reshape(b, s, -1)
    fc_w, fc_b = params['fc']
    return gru2_fc(seq, params['gru1'], params['gru2'], fc_w, fc_b)


# ----------------------------------------------------------------------------
# Main
# ----------------------------------------------------------------------------

if __name__ == "__main__":
    # Reduced SE-ResNeXt config (same topology as se_resnext101_32x4d, smaller).
    cfg = dict(
        stem=32,
        # (num_blocks, grouped-conv width, output channels, first-block stride)
        stages=[(2, 32, 64, 1),
                (2, 64, 128, 2),
                (2, 128, 256, 2),
                (2, 256, 512, 2)],
        groups=4,
        reduction=8,
        hidden=32,
        num_classes=10,
    )

    kg = KeyGen(42)
    params = build_params(kg, cfg)

    b, s, c, h, w = 2, 4, 3, 32, 32
    x = jax.random.normal(jax.random.PRNGKey(0), (b, s, c, h, w), jnp.float32)

    out = forward(x, params)
    out = jax.block_until_ready(out)

    assert out.shape == (b * s, cfg['num_classes']), out.shape
    assert bool(jnp.all(jnp.isfinite(out)))
    print("KERNEL_OK")
</pallas_src>

<mosaic_0001>
module attributes {stable_mosaic.version = 11 : i64} {
  func.func @_mm_bn_kernel(%arg0: i32, %arg1: memref<512x147xbf16, #tpu.memory_space<vmem>>, %arg2: memref<147x32xbf16, #tpu.memory_space<vmem>>, %arg3: memref<1x32xf32, #tpu.memory_space<vmem>>, %arg4: memref<1x32xf32, #tpu.memory_space<vmem>>, %arg5: memref<512x32xf32, #tpu.memory_space<vmem>>) attributes {dimension_semantics = [#tpu.dimension_semantics<parallel>], iteration_bounds = array<i64: 4>, scalar_prefetch = 0 : i64, scratch_operands = 0 : i64, tpu.core_type = #tpu.core_type<tc>, window_params = [{transform_indices = @transform_0, window_bounds = array<i64: 512, 147>}, {pipeline_mode = #tpu.pipeline_mode<synchronous>, transform_indices = @transform_1, window_bounds = array<i64: 147, 32>}, {pipeline_mode = #tpu.pipeline_mode<synchronous>, transform_indices = @transform_2, window_bounds = array<i64: 1, 32>}, {pipeline_mode = #tpu.pipeline_mode<synchronous>, transform_indices = @transform_3, window_bounds = array<i64: 1, 32>}, {transform_indices = @transform_4, window_bounds = array<i64: 512, 32>}]} {
    %c0 = arith.constant 0 : index
    %c0_0 = arith.constant 0 : index
    %0 = vector.load %arg1[%c0, %c0_0] : memref<512x147xbf16, #tpu.memory_space<vmem>>, vector<512x147xbf16>
    %c0_1 = arith.constant 0 : index
    %c0_2 = arith.constant 0 : index
    %1 = vector.load %arg2[%c0_1, %c0_2] : memref<147x32xbf16, #tpu.memory_space<vmem>>, vector<147x32xbf16>
    %cst = arith.constant dense<0.000000e+00> : vector<512x32xf32>
    %2 = tpu.matmul %0, %1, %cst {dimension_numbers = #tpu.dot_dimension_numbers<[1], [0], [0], [1], [0, 0, 1, 1], [], []>} : vector<512x147xbf16>, vector<147x32xbf16>, vector<512x32xf32> -> vector<512x32xf32>
    %c0_3 = arith.constant 0 : index
    %c0_4 = arith.constant 0 : index
    %3 = vector.load %arg3[%c0_3, %c0_4] : memref<1x32xf32, #tpu.memory_space<vmem>>, vector<1x32xf32>
    %4 = vector.broadcast %3 : vector<1x32xf32> to vector<512x32xf32>
    %5 = arith.mulf %2, %4 : vector<512x32xf32>
    %c0_5 = arith.constant 0 : index
    %c0_6 = arith.constant 0 : index
    %6 = vector.load %arg4[%c0_5, %c0_6] : memref<1x32xf32, #tpu.memory_space<vmem>>, vector<1x32xf32>
    %7 = vector.broadcast %6 : vector<1x32xf32> to vector<512x32xf32>
    %8 = arith.addf %5, %7 : vector<512x32xf32>
    %cst_7 = arith.constant 0.000000e+00 : f32
    %9 = vector.broadcast %cst_7 : f32 to vector<512x32xf32>
    %10 = arith.maximumf %8, %9 : vector<512x32xf32>
    %c0_8 = arith.constant 0 : index
    %c0_9 = arith.constant 0 : index
    %11 = vector.load %arg5[%c0_8, %c0_9] : memref<512x32xf32, #tpu.memory_space<vmem>>, vector<512x32xf32>
    tpu.vector_store %arg5[%c0_8, %c0_9], %10 {strides = array<i32>} : memref<512x32xf32, #tpu.memory_space<vmem>>, vector<512x32xf32>,
    return
  }
  func.func @transform_0(%arg0: i32) -> (i32, i32) {
    %c0_i32 = arith.constant 0 : i32
    %c0_i32_0 = arith.constant 0 : i32
    return %arg0, %c0_i32 : i32, i32
  }
  func.func @transform_1(%arg0: i32) -> (i32, i32) {
    %c0_i32 = arith.constant 0 : i32
    %c0_i32_0 = arith.constant 0 : i32
    %c0_i32_1 = arith.constant 0 : i32
    return %c0_i32, %c0_i32_0 : i32, i32
  }
  func.func @transform_2(%arg0: i32) -> (i32, i32) {
    %c0_i32 = arith.constant 0 : i32
    %c0_i32_0 = arith.constant 0 : i32
    %c0_i32_1 = arith.constant 0 : i32
    return %c0_i32, %c0_i32_0 : i32, i32
  }
  func.func @transform_3(%arg0: i32) -> (i32, i32) {
    %c0_i32 = arith.constant 0 : i32
    %c0_i32_0 = arith.constant 0 : i32
    %c0_i32_1 = arith.constant 0 : i32
    return %c0_i32, %c0_i32_0 : i32, i32
  }
  func.func @transform_4(%arg0: i32) -> (i32, i32) {
    %c0_i32 = arith.constant 0 : i32
    %c0_i32_0 = arith.constant 0 : i32
    return %arg0, %c0_i32 : i32, i32
  }
}

</mosaic_0001>

<llo_original>
// kernel: tpu_custom_call.1
$region0: #{tpu_custom_call.1}
  #allocation0 [shape = 'u32[]', space=smem, size = 0x4, offset = 0x4, fixed_abs, tag = 'smem constant byte address 0x4 - core index']
  #allocation1 [shape = 'u32[72,128]{1,0:T(1,128)}', space=vmem, size = 0x9000, scoped, tag = 'internal scratch']
  %s0 = inlined_call_operand.vmem [shape: bf16[2048,147], index: 0, kind: input, shape index: {}]
  %s1 = inlined_call_operand.vmem [shape: bf16[147,32], index: 1, kind: input, shape index: {}]
  %s2 = inlined_call_operand.vmem [shape: f32[1,32], index: 2, kind: input, shape index: {}]
  %s3 = inlined_call_operand.vmem [shape: f32[1,32], index: 3, kind: input, shape index: {}]
  %s4 = inlined_call_operand.vmem [shape: f32[2048,32], index: 4, kind: output, shape index: {}]
  %s5 = sld [smem:[#allocation0]]
  $region49: #{tpu_custom_call.1} parent=0
    _
  %s7 = ssub.s32 1, %s5
  %s8 = scalar_select 0, %s7, %s5
  loop: start=0, step=1, limit=6
  $region2: #{tpu_custom_call.1} parent=0 // loop_pre_header
    _
  $region3: #{tpu_custom_call.1} parent=0 // loop_header
    %s10 = sphi 0, %s14
    %p11 = scmp.ge.s32.totalorder %s10, 6
    %s20 = sphi 0, %s22
    %s23 = sphi 0, %s20
    %s24 = sphi 0, %s23
    %s40 = sphi 0, %s24
    %s44 = sphi 0, %s44
    %s46 = sphi 0, %s44
    %s47 = sphi 0, %s46
    %s61 = sphi 0, %s47
    %s65 = sphi 0, %s65
    %s67 = sphi 0, %s65
    %s68 = sphi 0, %s67
    %s82 = sphi 0, %s68
    %s86 = sphi 0, %s86
    %s88 = sphi 0, %s86
    %s89 = sphi 0, %s88
    %s103 = sphi 0, %s89
    %s109 = sphi 0, %s111
    %s112 = sphi 0, %s109
    %s113 = sphi 0, %s112
    %s129 = sphi 0, %s113
  $region4: #{tpu_custom_call.1} parent=0 // loop_header_branch
    %13 = sbr.rel (%p11) target = $region8
  $region5: #{tpu_custom_call.1} parent=0 // loop_body
    %s15 = ssub.s32 %s10, 1
    %s16 = ssub.s32 %s10, 2
    %s17 = sadd.s32 %s10, 1
    %s18 = ssub.s32 %s10, %s17
    %p19 = scmp.eq.s32.totalorder %s18, 0
    %s21 = sadd.s32 %s20, 1
    %s22 = scalar_select %p19, %s20, %s21
    %p25 = pneg %p19
    %p26 = scmp.eq.s32.totalorder %s10, 3
    %p27 = por %p25, %p26
    %p28 = scmp.ne.s32.totalorder %s20, %s23
    %p29 = scmp.eq.s32.totalorder %s10, 0
    %p30 = por %p28, %p29
    %p31 = scmp.ne.s32.totalorder %s20, %s23
    %p32 = scmp.eq.s32.totalorder %s15, 3
    %p33 = por %p31, %p32
    %p34 = scmp.ne.s32.totalorder %s23, %s24
    %p35 = scmp.eq.s32.totalorder %s15, 0
    %p36 = por %p34, %p35
    %p37 = scmp.ne.s32.totalorder %s23, %s24
    %p38 = scmp.eq.s32.totalorder %s16, 3
    %p39 = por %p37, %p38
    %p41 = scmp.ne.s32.totalorder %s24, %s40
    %p42 = scmp.eq.s32.totalorder %s16, 0
    %p43 = por %p41, %p42
    %s45 = sadd.s32 %s44, 1
    %p48 = scmp.eq.s32.totalorder %s10, 3
    %p49 = scmp.ne.s32.totalorder %s44, %s46
    %p50 = scmp.eq.s32.totalorder %s10, 0
    %p51 = por %p49, %p50
    %p52 = scmp.ne.s32.totalorder %s44, %s46
    %p53 = scmp.eq.s32.totalorder %s15, 3
    %p54 = por %p52, %p53
    %p55 = scmp.ne.s32.totalorder %s46, %s47
    %p56 = scmp.eq.s32.totalorder %s15, 0
    %p57 = por %p55, %p56
    %p58 = scmp.ne.s32.totalorder %s46, %s47
    %p59 = scmp.eq.s32.totalorder %s16, 3
    %p60 = por %p58, %p59
    %p62 = scmp.ne.s32.totalorder %s47, %s61
    %p63 = scmp.eq.s32.totalorder %s16, 0
    %p64 = por %p62, %p63
    %s66 = sadd.s32 %s65, 1
    %p69 = scmp.eq.s32.totalorder %s10, 3
    %p70 = scmp.ne.s32.totalorder %s65, %s67
    %p71 = scmp.eq.s32.totalorder %s10, 0
    %p72 = por %p70, %p71
    %p73 = scmp.ne.s32.totalorder %s65, %s67
    %p74 = scmp.eq.s32.totalorder %s15, 3
    %p75 = por %p73, %p74
    %p76 = scmp.ne.s32.totalorder %s67, %s68
    %p77 = scmp.eq.s32.totalorder %s15, 0
    %p78 = por %p76, %p77
    %p79 = scmp.ne.s32.totalorder %s67, %s68
    %p80 = scmp.eq.s32.totalorder %s16, 3
    %p81 = por %p79, %p80
    %p83 = scmp.ne.s32.totalorder %s68, %s82
    %p84 = scmp.eq.s32.totalorder %s16, 0
    %p85 = por %p83, %p84
    %s87 = sadd.s32 %s86, 1
    %p90 = scmp.eq.s32.totalorder %s10, 3
    %p91 = scmp.ne.s32.totalorder %s86, %s88
    %p92 = scmp.eq.s32.totalorder %s10, 0
    %p93 = por %p91, %p92
    %p94 = scmp.ne.s32.totalorder %s86, %s88
    %p95 = scmp.eq.s32.totalorder %s15, 3
    %p96 = por %p94, %p95
    %p97 = scmp.ne.s32.totalorder %s88, %s89
    %p98 = scmp.eq.s32.totalorder %s15, 0
    %p99 = por %p97, %p98
    %p100 = scmp.ne.s32.totalorder %s88, %s89
    %p101 = scmp.eq.s32.totalorder %s16, 3
    %p102 = por %p100, %p101
    %p104 = scmp.ne.s32.totalorder %s89, %s103
    %p105 = scmp.eq.s32.totalorder %s16, 0
    %p106 = por %p104, %p105
    %s107 = ssub.s32 %s10, %s17
    %p108 = scmp.eq.s32.totalorder %s107, 0
    %s110 = sadd.s32 %s109, 1
    %s111 = scalar_select %p108, %s109, %s110
    %p114 = pneg %p108
    %p115 = scmp.eq.s32.totalorder %s10, 3
    %p116 = por %p114, %p115
    %p117 = scmp.ne.s32.totalorder %s109, %s112
    %p118 = scmp.eq.s32.totalorder %s10, 0
    %p119 = por %p117, %p118
    %p120 = scmp.ne.s32.totalorder %s109, %s112
    %p121 = scmp.eq.s32.totalorder %s15, 3
    %p122 = por %p120, %p121
    %p123 = scmp.ne.s32.totalorder %s112, %s113
    %p124 = scmp.eq.s32.totalorder %s15, 0
    %p125 = por %p123, %p124
    %p126 = scmp.ne.s32.totalorder %s112, %s113
    %p127 = scmp.eq.s32.totalorder %s16, 3
    %p128 = por %p126, %p127
    %p130 = scmp.ne.s32.totalorder %s113, %s129
    %p131 = scmp.eq.s32.totalorder %s16, 0
    %p132 = por %p130, %p131
    %p133 = scmp.le.s32.totalorder 1, %s10
    %p134 = scmp.lt.s32.totalorder %s10, 5
    %p135 = pnand %p133, %p134
    %p136 = pneg %p135
    // Predicated region
    $region9: #{tpu_custom_call.1} parent=5 // pred_check
      _
    $region10: #{tpu_custom_call.1} parent=5 // pred_check_branch
      %138 = sbr.rel (%p135) target = $region12
    $region11: #{tpu_custom_call.1} parent=5 // pred_region
      %s139 = ssub.s32 %s10, 1
      // Predicated region
      $region13: #{tpu_custom_call.1} parent=11 // pred_check
        %p140 = pneg %p57
      $region14: #{tpu_custom_call.1} parent=11 // pred_check_branch
        %142 = sbr.rel (%p140) target = $region16
      $region15: #{tpu_custom_call.1} parent=11 // pred_region
        _
      $region16: #{tpu_custom_call.1} parent=11 // pred_fallthru
        _
      // Predicated region
      $region17: #{tpu_custom_call.1} parent=11 // pred_check
        %p143 = pneg %p78
      $region18: #{tpu_custom_call.1} parent=11 // pred_check_branch
        %145 = sbr.rel (%p143) target = $region20
      $region19: #{tpu_custom_call.1} parent=11 // pred_region
        _
      $region20: #{tpu_custom_call.1} parent=11 // pred_fallthru
        _
      // Predicated region
      $region21: #{tpu_custom_call.1} parent=11 // pred_check
        %p146 = pneg %p99
      $region22: #{tpu_custom_call.1} parent=11 // pred_check_branch
        %148 = sbr.rel (%p146) target = $region24
      $region23: #{tpu_custom_call.1} parent=11 // pred_region
        _
      $region24: #{tpu_custom_call.1} parent=11 // pred_fallthru
        _
    $region12: #{tpu_custom_call.1} parent=5 // pred_fallthru
      _
    %p149 = scmp.lt.s32.totalorder %s10, 4
    // Predicated region
    $region25: #{tpu_custom_call.1} parent=5 // pred_check
      %p150 = pneg %p149
    $region26: #{tpu_custom_call.1} parent=5 // pred_check_branch
      %152 = sbr.rel (%p150) target = $region28
    $region27: #{tpu_custom_call.1} parent=5 // pred_region
      // Predicated region
      $region29: #{tpu_custom_call.1} parent=27 // pred_check
        %p153 = pneg %p30
      $region30: #{tpu_custom_call.1} parent=27 // pred_check_branch
        %155 = sbr.rel (%p153) target = $region32
      $region31: #{tpu_custom_call.1} parent=27 // pred_region
        %s156 = smul.u32 64, %s10
        %p157 = scmp.lt.s32.totalorder %s156, 255
        %s158 = scalar_select %p157, %s156, 255
        %s159 = smul.addr %s158, 2
        %s160 = smul.addr %s159, 4
        %s161 = scalar_lea.vmem %s0, %s160
        %s162 = smul.u32 64, %s10
      $region32: #{tpu_custom_call.1} parent=27 // pred_fallthru
        _
    $region28: #{tpu_custom_call.1} parent=5 // pred_fallthru
      _
    %p163 = scmp.le.s32.totalorder 1, %s10
    %p164 = scmp.lt.s32.totalorder %s10, 5
    %p165 = pnand %p163, %p164
    %p166 = pneg %p165
    // Predicated region
    $region33: #{tpu_custom_call.1} parent=5 // pred_check
      _
    $region34: #{tpu_custom_call.1} parent=5 // pred_check_branch
      %168 = sbr.rel (%p165) target = $region36
    $region35: #{tpu_custom_call.1} parent=5 // pred_region
      %s169 = ssub.s32 %s10, 1
      %s170 = smul.u32 64, %s15
      %p171 = scmp.lt.s32.totalorder %s170, 255
      %s172 = scalar_select %p171, %s170, 255
      %s173 = smul.addr %s172, 2
      %s174 = smul.addr %s173, 4
      %s175 = scalar_lea.vmem %s0, %s174
      %p176 = pneg %p36
      %p177 = pneg %p33
      %p178 = pneg %p57
      %p179 = pneg %p54
      %p180 = pneg %p78
      %p181 = pneg %p75
      %p182 = pneg %p99
      %p183 = pneg %p96
      %p184 = pneg %p125
      %p185 = pneg %p122
      %s186 = smul.u32 64, %s15
      %p187 = scmp.lt.s32.totalorder %s186, 255
      %s188 = scalar_select %p187, %s186, 255
      %s189 = smul.addr %s188, 8
      %s190 = scalar_lea.vmem %s4, %s189
      %s191 = smul.u32 64, %s15
      %p192 = scmp.lt.s32.totalorder %s191, 255
      %s193 = scalar_select %p192, %s191, 255
      %s194 = smul.addr %s193, 2
      %s195 = smul.addr %s194, 4
      %s196 = scalar_lea.vmem %s0, %s195
      %s197 = smul.u32 64, %s15
      %s198 = smul.u32 64, %s15
      %p199 = scmp.lt.s32.totalorder %s198, 255
      %s200 = scalar_select %p199, %s198, 255
      %s201 = smul.addr %s200, 8
      %s202 = scalar_lea.vmem %s4, %s201
      %s203 = smul.u32 64, %s15
      %v205 = vld [vmem:[%s196] sm:$0xff]
      %v206 = vld [vmem:[%s196 + $0x8] sm:$0xff]
      %v207 = vld [vmem:[%s196 + $0x10] sm:$0xff]
      %v208 = vld [vmem:[%s196 + $0x18] sm:$0xff]
      %v209 = vld [vmem:[%s196 + $0x20] sm:$0xff]
      %v210 = vld [vmem:[%s196 + $0x28] sm:$0xff]
      %v211 = vld [vmem:[%s196 + $0x30] sm:$0xff]
      %v212 = vld [vmem:[%s196 + $0x38] sm:$0xff]
      %v213 = vld [vmem:[%s196 + $0x40] sm:$0xff]
      %v214 = vld [vmem:[%s196 + $0x48] sm:$0xff]
      %v215 = vld [vmem:[%s196 + $0x50] sm:$0xff]
      %v216 = vld [vmem:[%s196 + $0x58] sm:$0xff]
      %v217 = vld [vmem:[%s196 + $0x60] sm:$0xff]
      %v218 = vld [vmem:[%s196 + $0x68] sm:$0xff]
      %v219 = vld [vmem:[%s196 + $0x70] sm:$0xff]
      %v220 = vld [vmem:[%s196 + $0x78] sm:$0xff]
      %v221 = vld [vmem:[%s196 + $0x80] sm:$0xff]
      %v222 = vld [vmem:[%s196 + $0x88] sm:$0xff]
      %v223 = vld [vmem:[%s196 + $0x90] sm:$0xff]
      %v224 = vld [vmem:[%s196 + $0x98] sm:$0xff]
      %v225 = vld [vmem:[%s196 + $0xa0] sm:$0xff]
      %v226 = vld [vmem:[%s196 + $0xa8] sm:$0xff]
      %v227 = vld [vmem:[%s196 + $0xb0] sm:$0xff]
      %v228 = vld [vmem:[%s196 + $0xb8] sm:$0xff]
      %v229 = vld [vmem:[%s196 + $0xc0] sm:$0xff]
      %v230 = vld [vmem:[%s196 + $0xc8] sm:$0xff]
      %v231 = vld [vmem:[%s196 + $0xd0] sm:$0xff]
      %v232 = vld [vmem:[%s196 + $0xd8] sm:$0xff]
      %v233 = vld [vmem:[%s196 + $0xe0] sm:$0xff]
      %v234 = vld [vmem:[%s196 + $0xe8] sm:$0xff]
      %v235 = vld [vmem:[%s196 + $0xf0] sm:$0xff]
      %v236 = vld [vmem:[%s196 + $0xf8] sm:$0xff]
      %v237 = vld [vmem:[%s196 + $0x100] sm:$0xff]
      %v238 = vld [vmem:[%s196 + $0x108] sm:$0xff]
      %v239 = vld [vmem:[%s196 + $0x110] sm:$0xff]
      %v240 = vld [vmem:[%s196 + $0x118] sm:$0xff]
      %v241 = vld [vmem:[%s196 + $0x120] sm:$0xff]
      %v242 = vld [vmem:[%s196 + $0x128] sm:$0xff]
      %v243 = vld [vmem:[%s196 + $0x130] sm:$0xff]
      %v244 = vld [vmem:[%s196 + $0x138] sm:$0xff]
      %v245 = vld [vmem:[%s196 + $0x140] sm:$0xff]
      %v246 = vld [vmem:[%s196 + $0x148] sm:$0xff]
      %v247 = vld [vmem:[%s196 + $0x150] sm:$0xff]
      %v248 = vld [vmem:[%s196 + $0x158] sm:$0xff]
      %v249 = vld [vmem:[%s196 + $0x160] sm:$0xff]
      %v250 = vld [vmem:[%s196 + $0x168] sm:$0xff]
      %v251 = vld [vmem:[%s196 + $0x170] sm:$0xff]
      %v252 = vld [vmem:[%s196 + $0x178] sm:$0xff]
      %v253 = vld [vmem:[%s196 + $0x180] sm:$0xff]
      %v254 = vld [vmem:[%s196 + $0x188] sm:$0xff]
      %v255 = vld [vmem:[%s196 + $0x190] sm:$0xff]
      %v256 = vld [vmem:[%s196 + $0x198] sm:$0xff]
      %v257 = vld [vmem:[%s196 + $0x1a0] sm:$0xff]
      %v258 = vld [vmem:[%s196 + $0x1a8] sm:$0xff]
      %v259 = vld [vmem:[%s196 + $0x1b0] sm:$0xff]
      %v260 = vld [vmem:[%s196 + $0x1b8] sm:$0xff]
      %v261 = vld [vmem:[%s196 + $0x1c0] sm:$0xff]
      %v262 = vld [vmem:[%s196 + $0x1c8] sm:$0xff]
      %v263 = vld [vmem:[%s196 + $0x1d0] sm:$0xff]
      %v264 = vld [vmem:[%s196 + $0x1d8] sm:$0xff]
      %v265 = vld [vmem:[%s196 + $0x1e0] sm:$0xff]
      %v266 = vld [vmem:[%s196 + $0x1e8] sm:$0xff]
      %v267 = vld [vmem:[%s196 + $0x1f0] sm:$0xff]
      %v268 = vld [vmem:[%s196 + $0x1f8] sm:$0xff]
      %v269 = vld [vmem:[%s1] sm:$0xf]
      %v270 = vld [vmem:[%s1 + $0x4] sm:$0xf]
      %v271 = vld [vmem:[%s1 + $0x8] sm:$0xf]
      %v272 = vld [vmem:[%s1 + $0xc] sm:$0xf]
      %v273 = vld [vmem:[%s1 + $0x10] sm:$0xf]
      %v274 = vld [vmem:[%s1 + $0x14] sm:$0xf]
      %v275 = vld [vmem:[%s1 + $0x18] sm:$0xf]
      %v276 = vld [vmem:[%s1 + $0x1c] sm:$0xf]
      %v277 = vld [vmem:[%s1 + $0x20] sm:$0xf]
      %v278 = vld [vmem:[%s1 + $0x24] sm:$0xf]
      %v279 = vld [vmem:[%s1 + $0x28] sm:$0xf]
      %v280 = vld [vmem:[%s1 + $0x2c] sm:$0xf]
      %v281 = vld [vmem:[%s1 + $0x30] sm:$0xf]
      %v282 = vld [vmem:[%s1 + $0x34] sm:$0xf]
      %v283 = vld [vmem:[%s1 + $0x38] sm:$0xf]
      %v284 = vld [vmem:[%s1 + $0x3c] sm:$0xf]
      %v285 = vld [vmem:[%s1 + $0x40] sm:$0xf]
      %v286 = vld [vmem:[%s1 + $0x44] sm:$0xf]
      %v287 = vld [vmem:[%s1 + $0x48] sm:$0x3]
      %v352 = vunpack.c.l.b16 %v205
      %v353 = vunpack.c.h.b16 %v205
      %v354 = vunpack.c.l.b16 %v206
      %v355 = vunpack.c.h.b16 %v206
      %v356 = vunpack.c.l.b16 %v207
      %v357 = vunpack.c.h.b16 %v207
      %v358 = vunpack.c.l.b16 %v208
      %v359 = vunpack.c.h.b16 %v208
      %v360 = vunpack.c.l.b16 %v209
      %v361 = vunpack.c.h.b16 %v209
      %v362 = vunpack.c.l.b16 %v210
      %v363 = vunpack.c.h.b16 %v210
      %v364 = vunpack.c.l.b16 %v211
      %v365 = vunpack.c.h.b16 %v211
      %v366 = vunpack.c.l.b16 %v212
      %v367 = vunpack.c.h.b16 %v212
      %v368 = vunpack.c.l.b16 %v213
      %v369 = vunpack.c.h.b16 %v213
      %v370 = vunpack.c.l.b16 %v214
      %v371 = vunpack.c.h.b16 %v214
      %v372 = vunpack.c.l.b16 %v215
      %v373 = vunpack.c.h.b16 %v215
      %v374 = vunpack.c.l.b16 %v216
      %v375 = vunpack.c.h.b16 %v216
      %v376 = vunpack.c.l.b16 %v217
      %v377 = vunpack.c.h.b16 %v217
      %v378 = vunpack.c.l.b16 %v218
      %v379 = vunpack.c.h.b16 %v218
      %v380 = vunpack.c.l.b16 %v219
      %v381 = vunpack.c.h.b16 %v219
      %v382 = vunpack.c.l.b16 %v220
      %v383 = vunpack.c.h.b16 %v220
      %v384 = vunpack.c.l.b16 %v221
      %v385 = vunpack.c.h.b16 %v221
      %v386 = vunpack.c.l.b16 %v222
      %v387 = vunpack.c.h.b16 %v222
      %v388 = vunpack.c.l.b16 %v223
      %v389 = vunpack.c.h.b16 %v223
      %v390 = vunpack.c.l.b16 %v224
      %v391 = vunpack.c.h.b16 %v224
      %v392 = vunpack.c.l.b16 %v225
      %v393 = vunpack.c.h.b16 %v225
      %v394 = vunpack.c.l.b16 %v226
      %v395 = vunpack.c.h.b16 %v226
      %v396 = vunpack.c.l.b16 %v227
      %v397 = vunpack.c.h.b16 %v227
      %v398 = vunpack.c.l.b16 %v228
      %v399 = vunpack.c.h.b16 %v228
      %v400 = vunpack.c.l.b16 %v229
      %v401 = vunpack.c.h.b16 %v229
      %v402 = vunpack.c.l.b16 %v230
      %v403 = vunpack.c.h.b16 %v230
      %v404 = vunpack.c.l.b16 %v231
      %v405 = vunpack.c.h.b16 %v231
      %v406 = vunpack.c.l.b16 %v232
      %v407 = vunpack.c.h.b16 %v232
      %v408 = vunpack.c.l.b16 %v233
      %v409 = vunpack.c.h.b16 %v233
      %v410 = vunpack.c.l.b16 %v234
      %v411 = vunpack.c.h.b16 %v234
      %v412 = vunpack.c.l.b16 %v235
      %v413 = vunpack.c.h.b16 %v235
      %v414 = vunpack.c.l.b16 %v236
      %v415 = vunpack.c.h.b16 %v236
      %v416 = vunpack.c.l.b16 %v237
      %v417 = vunpack.c.h.b16 %v237
      %v418 = vunpack.c.l.b16 %v238
      %v419 = vunpack.c.h.b16 %v238
      %v420 = vunpack.c.l.b16 %v239
      %v421 = vunpack.c.h.b16 %v239
      %v422 = vunpack.c.l.b16 %v240
      %v423 = vunpack.c.h.b16 %v240
      %v424 = vunpack.c.l.b16 %v241
      %v425 = vunpack.c.h.b16 %v241
      %v426 = vunpack.c.l.b16 %v242
      %v427 = vunpack.c.h.b16 %v242
      %v428 = vunpack.c.l.b16 %v243
      %v429 = vunpack.c.h.b16 %v243
      %v430 = vunpack.c.l.b16 %v244
      %v431 = vunpack.c.h.b16 %v244
      %v432 = vunpack.c.l.b16 %v245
      %v433 = vunpack.c.h.b16 %v245
      %v434 = vunpack.c.l.b16 %v246
      %v435 = vunpack.c.h.b16 %v246
      %v436 = vunpack.c.l.b16 %v247
      %v437 = vunpack.c.h.b16 %v247
      %v438 = vunpack.c.l.b16 %v248
      %v439 = vunpack.c.h.b16 %v248
      %v440 = vunpack.c.l.b16 %v249
      %v441 = vunpack.c.h.b16 %v249
      %v442 = vunpack.c.l.b16 %v250
      %v443 = vunpack.c.h.b16 %v250
      %v444 = vunpack.c.l.b16 %v251
      %v445 = vunpack.c.h.b16 %v251
      %v446 = vunpack.c.l.b16 %v252
      %v447 = vunpack.c.h.b16 %v252
      %v448 = vunpack.c.l.b16 %v253
      %v449 = vunpack.c.h.b16 %v253
      %v450 = vunpack.c.l.b16 %v254
      %v451 = vunpack.c.h.b16 %v254
      %v452 = vunpack.c.l.b16 %v255
      %v453 = vunpack.c.h.b16 %v255
      %v454 = vunpack.c.l.b16 %v256
      %v455 = vunpack.c.h.b16 %v256
      %v456 = vunpack.c.l.b16 %v257
      %v457 = vunpack.c.h.b16 %v257
      %v458 = vunpack.c.l.b16 %v258
      %v459 = vunpack.c.h.b16 %v258
      %v460 = vunpack.c.l.b16 %v259
      %v461 = vunpack.c.h.b16 %v259
      %v462 = vunpack.c.l.b16 %v260
      %v463 = vunpack.c.h.b16 %v260
      %v464 = vunpack.c.l.b16 %v261
      %v465 = vunpack.c.h.b16 %v261
      %v466 = vunpack.c.l.b16 %v262
      %v467 = vunpack.c.h.b16 %v262
      %v468 = vunpack.c.l.b16 %v263
      %v469 = vunpack.c.h.b16 %v263
      %v470 = vunpack.c.l.b16 %v264
      %v471 = vunpack.c.h.b16 %v264
      %v472 = vunpack.c.l.b16 %v265
      %v473 = vunpack.c.h.b16 %v265
      %v474 = vunpack.c.l.b16 %v266
      %v475 = vunpack.c.h.b16 %v266
      %v476 = vunpack.c.l.b16 %v267
      %v477 = vunpack.c.h.b16 %v267
      %v478 = vunpack.c.l.b16 %v268
      %v479 = vunpack.c.h.b16 %v268
      %v480 = vpack.c.b16 %v354, %v352
      %v481 = vpack.c.b16 %v355, %v353
      %v482 = vpack.c.b16 %v358, %v356
      %v483 = vpack.c.b16 %v359, %v357
      %v484 = vpack.c.b16 %v362, %v360
      %v485 = vpack.c.b16 %v363, %v361
      %v486 = vpack.c.b16 %v366, %v364
      %v487 = vpack.c.b16 %v367, %v365
      %v488 = vpack.c.b16 %v370, %v368
      %v489 = vpack.c.b16 %v371, %v369
      %v490 = vpack.c.b16 %v374, %v372
      %v491 = vpack.c.b16 %v375, %v373
      %v492 = vpack.c.b16 %v378, %v376
      %v493 = vpack.c.b16 %v379, %v377
      %v494 = vpack.c.b16 %v382, %v380
      %v495 = vpack.c.b16 %v383, %v381
      %v496 = vpack.c.b16 %v386, %v384
      %v497 = vpack.c.b16 %v387, %v385
      %v498 = vpack.c.b16 %v390, %v388
      %v499 = vpack.c.b16 %v391, %v389
      %v500 = vpack.c.b16 %v394, %v392
      %v501 = vpack.c.b16 %v395, %v393
      %v502 = vpack.c.b16 %v398, %v396
      %v503 = vpack.c.b16 %v399, %v397
      %v504 = vpack.c.b16 %v402, %v400
      %v505 = vpack.c.b16 %v403, %v401
      %v506 = vpack.c.b16 %v406, %v404
      %v507 = vpack.c.b16 %v407, %v405
      %v508 = vpack.c.b16 %v410, %v408
      %v509 = vpack.c.b16 %v411, %v409
      %v510 = vpack.c.b16 %v414, %v412
      %v511 = vpack.c.b16 %v415, %v413
      %v512 = vpack.c.b16 %v418, %v416
      %v513 = vpack.c.b16 %v419, %v417
      %v514 = vpack.c.b16 %v422, %v420
      %v515 = vpack.c.b16 %v423, %v421
      %v516 = vpack.c.b16 %v426, %v424
      %v517 = vpack.c.b16 %v427, %v425
      %v518 = vpack.c.b16 %v430, %v428
      %v519 = vpack.c.b16 %v431, %v429
      %v520 = vpack.c.b16 %v434, %v432
      %v521 = vpack.c.b16 %v435, %v433
      %v522 = vpack.c.b16 %v438, %v436
      %v523 = vpack.c.b16 %v439, %v437
      %v524 = vpack.c.b16 %v442, %v440
      %v525 = vpack.c.b16 %v443, %v441
      %v526 = vpack.c.b16 %v446, %v444
      %v527 = vpack.c.b16 %v447, %v445
      %v528 = vpack.c.b16 %v450, %v448
      %v529 = vpack.c.b16 %v451, %v449
      %v530 = vpack.c.b16 %v454, %v452
      %v531 = vpack.c.b16 %v455, %v453
      %v532 = vpack.c.b16 %v458, %v456
      %v533 = vpack.c.b16 %v459, %v457
      %v534 = vpack.c.b16 %v462, %v460
      %v535 = vpack.c.b16 %v463, %v461
      %v536 = vpack.c.b16 %v466, %v464
      %v537 = vpack.c.b16 %v467, %v465
      %v538 = vpack.c.b16 %v470, %v468
      %v539 = vpack.c.b16 %v471, %v469
      %v540 = vpack.c.b16 %v474, %v472
      %v541 = vpack.c.b16 %v475, %v473
      %v542 = vpack.c.b16 %v478, %v476
      %v543 = vpack.c.b16 %v479, %v477
      %v595 = vunpack.c.l.b16 %v269
      %v596 = vunpack.c.l.b16 %v270
      %v597 = vunpack.c.l.b16 %v271
      %v598 = vunpack.c.l.b16 %v272
      %v599 = vunpack.c.l.b16 %v273
      %v600 = vunpack.c.l.b16 %v274
      %v601 = vunpack.c.l.b16 %v275
      %v602 = vunpack.c.l.b16 %v276
      %v603 = vunpack.c.l.b16 %v277
      %v604 = vunpack.c.l.b16 %v278
      %v605 = vunpack.c.l.b16 %v279
      %v606 = vunpack.c.l.b16 %v280
      %v607 = vunpack.c.l.b16 %v281
      %v608 = vunpack.c.l.b16 %v282
      %v609 = vunpack.c.l.b16 %v283
      %v610 = vunpack.c.l.b16 %v284
      %v611 = vunpack.c.l.b16 %v285
      %v612 = vunpack.c.l.b16 %v286
      %v613 = vunpack.c.l.b16 %v287
      %v614 = vpack.c.b16 %v596, %v595
      %v615 = vpack.c.b16 %v598, %v597
      %v616 = vpack.c.b16 %v600, %v599
      %v617 = vpack.c.b16 %v602, %v601
      %v618 = vpack.c.b16 %v604, %v603
      %v619 = vpack.c.b16 %v606, %v605
      %v620 = vpack.c.b16 %v608, %v607
      %v621 = vpack.c.b16 %v610, %v609
      %v622 = vpack.c.b16 %v612, %v611
      %v623 = vpack.c.b16 %v613, %v613
      %vm633 = vcmask 154624
      %v635 = vsel %vm633, %v481, 0
      %v638 = vsel %vm633, %v483, 0
      %v641 = vsel %vm633, %v485, 0
      %v644 = vsel %vm633, %v487, 0
      %v647 = vsel %vm633, %v489, 0
      %v650 = vsel %vm633, %v491, 0
      %v653 = vsel %vm633, %v493, 0
      %v656 = vsel %vm633, %v495, 0
      %v659 = vsel %vm633, %v497, 0
      %v662 = vsel %vm633, %v499, 0
      %v665 = vsel %vm633, %v501, 0
      %v668 = vsel %vm633, %v503, 0
      %v671 = vsel %vm633, %v505, 0
      %v674 = vsel %vm633, %v507, 0
      %v677 = vsel %vm633, %v509, 0
      %v680 = vsel %vm633, %v511, 0
      %v683 = vsel %vm633, %v513, 0
      %v686 = vsel %vm633, %v515, 0
      %v689 = vsel %vm633, %v517, 0
      %v692 = vsel %vm633, %v519, 0
      %v695 = vsel %vm633, %v521, 0
      %v698 = vsel %vm633, %v523, 0
      %v701 = vsel %vm633, %v525, 0
      %v704 = vsel %vm633, %v527, 0
      %v707 = vsel %vm633, %v529, 0
      %v710 = vsel %vm633, %v531, 0
      %v713 = vsel %vm633, %v533, 0
      %v716 = vsel %vm633, %v535, 0
      %v719 = vsel %vm633, %v537, 0
      %v722 = vsel %vm633, %v539, 0
      %v725 = vsel %vm633, %v541, 0
      %v728 = vsel %vm633, %v543, 0
      %vm730 = vcmask 1040384
      %vm731 = vcmask 1041408
      %v732 = vsel %vm730, 4294967295, 65535
      %v733 = vsel %vm731, %v732, 0
      %v735 = vand.u32 %v623, %v733
      %737 = vmatpush.bf16.msra.mxu0 %v621
      %738 = vmatpush.bf16.msra.mxu0 %v620
      %739 = vmatpush.bf16.msra.mxu0 %v619
      %740 = vmatpush.bf16.msra.mxu0 %v618
      %741 = vmatpush.bf16.msra.mxu0 %v617
      %742 = vmatpush.bf16.msra.mxu0 %v616
      %743 = vmatpush.bf16.msra.mxu0 %v615
      %744 = vmatpush.bf16.msra.mxu0 %v614
      %745 = vmatmul.bf16.gmra.mxu0 %v480
      %v746 = vpop.f32.mrf.mxu0
      %v747 = vadd.f32 0.0, %v746
      %v748 = vpop.f32.mrf.mxu0
      %v749 = vadd.f32 0.0, %v748
      %750 = vmatmul.bf16.gmra.mxu0 %v482
      %v751 = vpop.f32.mrf.mxu0
      %v752 = vadd.f32 0.0, %v751
      %v753 = vpop.f32.mrf.mxu0
      %v754 = vadd.f32 0.0, %v753
      %755 = vmatmul.bf16.gmra.mxu0 %v484
      %v756 = vpop.f32.mrf.mxu0
      %v757 = vadd.f32 0.0, %v756
      %v758 = vpop.f32.mrf.mxu0
      %v759 = vadd.f32 0.0, %v758
      %760 = vmatmul.bf16.gmra.mxu0 %v486
      %v761 = vpop.f32.mrf.mxu0
      %v762 = vadd.f32 0.0, %v761
      %v763 = vpop.f32.mrf.mxu0
      %v764 = vadd.f32 0.0, %v763
      %765 = vmatmul.bf16.gmra.mxu0 %v488
      %v766 = vpop.f32.mrf.mxu0
      %v767 = vadd.f32 0.0, %v766
      %v768 = vpop.f32.mrf.mxu0
      %v769 = vadd.f32 0.0, %v768
      %770 = vmatmul.bf16.gmra.mxu0 %v490
      %v771 = vpop.f32.mrf.mxu0
      %v772 = vadd.f32 0.0, %v771
      %v773 = vpop.f32.mrf.mxu0
      %v774 = vadd.f32 0.0, %v773
      %775 = vmatmul.bf16.gmra.mxu0 %v492
      %v776 = vpop.f32.mrf.mxu0
      %v777 = vadd.f32 0.0, %v776
      %v778 = vpop.f32.mrf.mxu0
      %v779 = vadd.f32 0.0, %v778
      %780 = vmatmul.bf16.gmra.mxu0 %v494
      %v781 = vpop.f32.mrf.mxu0
      %v782 = vadd.f32 0.0, %v781
      %v783 = vpop.f32.mrf.mxu0
      %v784 = vadd.f32 0.0, %v783
      %785 = vmatmul.bf16.gmra.mxu0 %v496
      %v786 = vpop.f32.mrf.mxu0
      %v787 = vadd.f32 0.0, %v786
      %v788 = vpop.f32.mrf.mxu0
      %v789 = vadd.f32 0.0, %v788
      %790 = vmatmul.bf16.gmra.mxu0 %v498
      %v791 = vpop.f32.mrf.mxu0
      %v792 = vadd.f32 0.0, %v791
      %v793 = vpop.f32.mrf.mxu0
      %v794 = vadd.f32 0.0, %v793
      %795 = vmatmul.bf16.gmra.mxu0 %v500
      %v796 = vpop.f32.mrf.mxu0
      %v797 = vadd.f32 0.0, %v796
      %v798 = vpop.f32.mrf.mxu0
      %v799 = vadd.f32 0.0, %v798
      %800 = vmatmul.bf16.gmra.mxu0 %v502
      %v801 = vpop.f32.mrf.mxu0
      %v802 = vadd.f32 0.0, %v801
      %v803 = vpop.f32.mrf.mxu0
      %v804 = vadd.f32 0.0, %v803
      %805 = vmatmul.bf16.gmra.mxu0 %v504
      %v806 = vpop.f32.mrf.mxu0
      %v807 = vadd.f32 0.0, %v806
      %v808 = vpop.f32.mrf.mxu0
      %v809 = vadd.f32 0.0, %v808
      %810 = vmatmul.bf16.gmra.mxu0 %v506
      %v811 = vpop.f32.mrf.mxu0
      %v812 = vadd.f32 0.0, %v811
      %v813 = vpop.f32.mrf.mxu0
      %v814 = vadd.f32 0.0, %v813
      %815 = vmatmul.bf16.gmra.mxu0 %v508
      %v816 = vpop.f32.mrf.mxu0
      %v817 = vadd.f32 0.0, %v816
      %v818 = vpop.f32.mrf.mxu0
      %v819 = vadd.f32 0.0, %v818
      %820 = vmatmul.bf16.gmra.mxu0 %v510
      %v821 = vpop.f32.mrf.mxu0
      %v822 = vadd.f32 0.0, %v821
      %v823 = vpop.f32.mrf.mxu0
      %v824 = vadd.f32 0.0, %v823
      %825 = vmatmul.bf16.gmra.mxu0 %v512
      %v826 = vpop.f32.mrf.mxu0
      %v827 = vadd.f32 0.0, %v826
      %v828 = vpop.f32.mrf.mxu0
      %v829 = vadd.f32 0.0, %v828
      %830 = vmatmul.bf16.gmra.mxu0 %v514
      %v831 = vpop.f32.mrf.mxu0
      %v832 = vadd.f32 0.0, %v831
      %v833 = vpop.f32.mrf.mxu0
      %v834 = vadd.f32 0.0, %v833
      %835 = vmatmul.bf16.gmra.mxu0 %v516
      %v836 = vpop.f32.mrf.mxu0
      %v837 = vadd.f32 0.0, %v836
      %v838 = vpop.f32.mrf.mxu0
      %v839 = vadd.f32 0.0, %v838
      %840 = vmatmul.bf16.gmra.mxu0 %v518
      %v841 = vpop.f32.mrf.mxu0
      %v842 = vadd.f32 0.0, %v841
      %v843 = vpop.f32.mrf.mxu0
      %v844 = vadd.f32 0.0, %v843
      %845 = vmatmul.bf16.gmra.mxu0 %v520
      %v846 = vpop.f32.mrf.mxu0
      %v847 = vadd.f32 0.0, %v846
      %v848 = vpop.f32.mrf.mxu0
      %v849 = vadd.f32 0.0, %v848
      %850 = vmatmul.bf16.gmra.mxu0 %v522
      %v851 = vpop.f32.mrf.mxu0
      %v852 = vadd.f32 0.0, %v851
      %v853 = vpop.f32.mrf.mxu0
      %v854 = vadd.f32 0.0, %v853
      %855 = vmatmul.bf16.gmra.mxu0 %v524
      %v856 = vpop.f32.mrf.mxu0
      %v857 = vadd.f32 0.0, %v856
      %v858 = vpop.f32.mrf.mxu0
      %v859 = vadd.f32 0.0, %v858
      %860 = vmatmul.bf16.gmra.mxu0 %v526
      %v861 = vpop.f32.mrf.mxu0
      %v862 = vadd.f32 0.0, %v861
      %v863 = vpop.f32.mrf.mxu0
      %v864 = vadd.f32 0.0, %v863
      %865 = vmatmul.bf16.gmra.mxu0 %v528
      %v866 = vpop.f32.mrf.mxu0
      %v867 = vadd.f32 0.0, %v866
      %v868 = vpop.f32.mrf.mxu0
      %v869 = vadd.f32 0.0, %v868
      %870 = vmatmul.bf16.gmra.mxu0 %v530
      %v871 = vpop.f32.mrf.mxu0
      %v872 = vadd.f32 0.0, %v871
      %v873 = vpop.f32.mrf.mxu0
      %v874 = vadd.f32 0.0, %v873
      %875 = vmatmul.bf16.gmra.mxu0 %v532
      %v876 = vpop.f32.mrf.mxu0
      %v877 = vadd.f32 0.0, %v876
      %v878 = vpop.f32.mrf.mxu0
      %v879 = vadd.f32 0.0, %v878
      %880 = vmatmul.bf16.gmra.mxu0 %v534
      %v881 = vpop.f32.mrf.mxu0
      %v882 = vadd.f32 0.0, %v881
      %v883 = vpop.f32.mrf.mxu0
      %v884 = vadd.f32 0.0, %v883
      %885 = vmatmul.bf16.gmra.mxu0 %v536
      %v886 = vpop.f32.mrf.mxu0
      %v887 = vadd.f32 0.0, %v886
      %v888 = vpop.f32.mrf.mxu0
      %v889 = vadd.f32 0.0, %v888
      %890 = vmatmul.bf16.gmra.mxu0 %v538
      %v891 = vpop.f32.mrf.mxu0
      %v892 = vadd.f32 0.0, %v891
      %v893 = vpop.f32.mrf.mxu0
      %v894 = vadd.f32 0.0, %v893
      %895 = vmatmul.bf16.gmra.mxu0 %v540
      %v896 = vpop.f32.mrf.mxu0
      %v897 = vadd.f32 0.0, %v896
      %v898 = vpop.f32.mrf.mxu0
      %v899 = vadd.f32 0.0, %v898
      %900 = vmatmul.bf16.gmra.mxu0 %v542
      %v901 = vpop.f32.mrf.mxu0
      %v902 = vadd.f32 0.0, %v901
      %v903 = vpop.f32.mrf.mxu0
      %v904 = vadd.f32 0.0, %v903
      %905 = vdwg.mxu0
      %906 = vmatpush.bf16.msra.mxu0 0
      %907 = vmatpush.bf16.msra.mxu0 0
      %908 = vmatpush.bf16.msra.mxu0 0
      %909 = vmatpush.bf16.msra.mxu0 0
      %910 = vmatpush.bf16.msra.mxu0 0
      %911 = vmatpush.bf16.msra.mxu0 0
      %912 = vmatpush.bf16.msra.mxu0 %v735
      %913 = vmatpush.bf16.msra.mxu0 %v622
      %914 = vmatmul.bf16.gmra.mxu0 %v635
      %v915 = vpop.f32.mrf.mxu0
      %v916 = vadd.f32 %v747, %v915
      %v917 = vpop.f32.mrf.mxu0
      %v918 = vadd.f32 %v749, %v917
      %919 = vmatmul.bf16.gmra.mxu0 %v638
      %v920 = vpop.f32.mrf.mxu0
      %v921 = vadd.f32 %v752, %v920
      %v922 = vpop.f32.mrf.mxu0
      %v923 = vadd.f32 %v754, %v922
      %924 = vmatmul.bf16.gmra.mxu0 %v641
      %v925 = vpop.f32.mrf.mxu0
      %v926 = vadd.f32 %v757, %v925
      %v927 = vpop.f32.mrf.mxu0
      %v928 = vadd.f32 %v759, %v927
      %929 = vmatmul.bf16.gmra.mxu0 %v644
      %v930 = vpop.f32.mrf.mxu0
      %v931 = vadd.f32 %v762, %v930
      %v932 = vpop.f32.mrf.mxu0
      %v933 = vadd.f32 %v764, %v932
      %934 = vmatmul.bf16.gmra.mxu0 %v647
      %v935 = vpop.f32.mrf.mxu0
      %v936 = vadd.f32 %v767, %v935
      %v937 = vpop.f32.mrf.mxu0
      %v938 = vadd.f32 %v769, %v937
      %939 = vmatmul.bf16.gmra.mxu0 %v650
      %v940 = vpop.f32.mrf.mxu0
      %v941 = vadd.f32 %v772, %v940
      %v942 = vpop.f32.mrf.mxu0
      %v943 = vadd.f32 %v774, %v942
      %944 = vmatmul.bf16.gmra.mxu0 %v653
      %v945 = vpop.f32.mrf.mxu0
      %v946 = vadd.f32 %v777, %v945
      %v947 = vpop.f32.mrf.mxu0
      %v948 = vadd.f32 %v779, %v947
      %949 = vmatmul.bf16.gmra.mxu0 %v656
      %v950 = vpop.f32.mrf.mxu0
      %v951 = vadd.f32 %v782, %v950
      %v952 = vpop.f32.mrf.mxu0
      %v953 = vadd.f32 %v784, %v952
      %954 = vmatmul.bf16.gmra.mxu0 %v659
      %v955 = vpop.f32.mrf.mxu0
      %v956 = vadd.f32 %v787, %v955
      %v957 = vpop.f32.mrf.mxu0
      %v958 = vadd.f32 %v789, %v957
      %959 = vmatmul.bf16.gmra.mxu0 %v662
      %v960 = vpop.f32.mrf.mxu0
      %v961 = vadd.f32 %v792, %v960
      %v962 = vpop.f32.mrf.mxu0
      %v963 = vadd.f32 %v794, %v962
      %964 = vmatmul.bf16.gmra.mxu0 %v665
      %v965 = vpop.f32.mrf.mxu0
      %v966 = vadd.f32 %v797, %v965
      %v967 = vpop.f32.mrf.mxu0
      %v968 = vadd.f32 %v799, %v967
      %969 = vmatmul.bf16.gmra.mxu0 %v668
      %v970 = vpop.f32.mrf.mxu0
      %v971 = vadd.f32 %v802, %v970
      %v972 = vpop.f32.mrf.mxu0
      %v973 = vadd.f32 %v804, %v972
      %974 = vmatmul.bf16.gmra.mxu0 %v671
      %v975 = vpop.f32.mrf.mxu0
      %v976 = vadd.f32 %v807, %v975
      %v977 = vpop.f32.mrf.mxu0
      %v978 = vadd.f32 %v809, %v977
      %979 = vmatmul.bf16.gmra.mxu0 %v674
      %v980 = vpop.f32.mrf.mxu0
      %v981 = vadd.f32 %v812, %v980
      %v982 = vpop.f32.mrf.mxu0
      %v983 = vadd.f32 %v814, %v982
      %984 = vmatmul.bf16.gmra.mxu0 %v677
      %v985 = vpop.f32.mrf.mxu0
      %v986 = vadd.f32 %v817, %v985
      %v987 = vpop.f32.mrf.mxu0
      %v988 = vadd.f32 %v819, %v987
      %989 = vmatmul.bf16.gmra.mxu0 %v680
      %v990 = vpop.f32.mrf.mxu0
      %v991 = vadd.f32 %v822, %v990
      %v992 = vpop.f32.mrf.mxu0
      %v993 = vadd.f32 %v824, %v992
      %994 = vmatmul.bf16.gmra.mxu0 %v683
      %v995 = vpop.f32.mrf.mxu0
      %v996 = vadd.f32 %v827, %v995
      %v997 = vpop.f32.mrf.mxu0
      %v998 = vadd.f32 %v829, %v997
      %999 = vmatmul.bf16.gmra.mxu0 %v686
      %v1000 = vpop.f32.mrf.mxu0
      %v1001 = vadd.f32 %v832, %v1000
      %v1002 = vpop.f32.mrf.mxu0
      %v1003 = vadd.f32 %v834, %v1002
      %1004 = vmatmul.bf16.gmra.mxu0 %v689
      %v1005 = vpop.f32.mrf.mxu0
      %v1006 = vadd.f32 %v837, %v1005
      %v1007 = vpop.f32.mrf.mxu0
      %v1008 = vadd.f32 %v839, %v1007
      %1009 = vmatmul.bf16.gmra.mxu0 %v692
      %v1010 = vpop.f32.mrf.mxu0
      %v1011 = vadd.f32 %v842, %v1010
      %v1012 = vpop.f32.mrf.mxu0
      %v1013 = vadd.f32 %v844, %v1012
      %1014 = vmatmul.bf16.gmra.mxu0 %v695
      %v1015 = vpop.f32.mrf.mxu0
      %v1016 = vadd.f32 %v847, %v1015
      %v1017 = vpop.f32.mrf.mxu0
      %v1018 = vadd.f32 %v849, %v1017
      %1019 = vmatmul.bf16.gmra.mxu0 %v698
      %v1020 = vpop.f32.mrf.mxu0
      %v1021 = vadd.f32 %v852, %v1020
      %v1022 = vpop.f32.mrf.mxu0
      %v1023 = vadd.f32 %v854, %v1022
      %1024 = vmatmul.bf16.gmra.mxu0 %v701
      %v1025 = vpop.f32.mrf.mxu0
      %v1026 = vadd.f32 %v857, %v1025
      %v1027 = vpop.f32.mrf.mxu0
      %v1028 = vadd.f32 %v859, %v1027
      %1029 = vmatmul.bf16.gmra.mxu0 %v704
      %v1030 = vpop.f32.mrf.mxu0
      %v1031 = vadd.f32 %v862, %v1030
      %v1032 = vpop.f32.mrf.mxu0
      %v1033 = vadd.f32 %v864, %v1032
      %1034 = vmatmul.bf16.gmra.mxu0 %v707
      %v1035 = vpop.f32.mrf.mxu0
      %v1036 = vadd.f32 %v867, %v1035
      %v1037 = vpop.f32.mrf.mxu0
      %v1038 = vadd.f32 %v869, %v1037
      %1039 = vmatmul.bf16.gmra.mxu0 %v710
      %v1040 = vpop.f32.mrf.mxu0
      %v1041 = vadd.f32 %v872, %v1040
      %v1042 = vpop.f32.mrf.mxu0
      %v1043 = vadd.f32 %v874, %v1042
      %1044 = vmatmul.bf16.gmra.mxu0 %v713
      %v1045 = vpop.f32.mrf.mxu0
      %v1046 = vadd.f32 %v877, %v1045
      %v1047 = vpop.f32.mrf.mxu0
      %v1048 = vadd.f32 %v879, %v1047
      %1049 = vmatmul.bf16.gmra.mxu0 %v716
      %v1050 = vpop.f32.mrf.mxu0
      %v1051 = vadd.f32 %v882, %v1050
      %v1052 = vpop.f32.mrf.mxu0
      %v1053 = vadd.f32 %v884, %v1052
      %1054 = vmatmul.bf16.gmra.mxu0 %v719
      %v1055 = vpop.f32.mrf.mxu0
      %v1056 = vadd.f32 %v887, %v1055
      %v1057 = vpop.f32.mrf.mxu0
      %v1058 = vadd.f32 %v889, %v1057
      %1059 = vmatmul.bf16.gmra.mxu0 %v722
      %v1060 = vpop.f32.mrf.mxu0
      %v1061 = vadd.f32 %v892, %v1060
      %v1062 = vpop.f32.mrf.mxu0
      %v1063 = vadd.f32 %v894, %v1062
      %1064 = vmatmul.bf16.gmra.mxu0 %v725
      %v1065 = vpop.f32.mrf.mxu0
      %v1066 = vadd.f32 %v897, %v1065
      %v1067 = vpop.f32.mrf.mxu0
      %v1068 = vadd.f32 %v899, %v1067
      %1069 = vmatmul.bf16.gmra.mxu0 %v728
      %v1070 = vpop.f32.mrf.mxu0
      %v1071 = vadd.f32 %v902, %v1070
      %v1072 = vpop.f32.mrf.mxu0
      %v1073 = vadd.f32 %v904, %v1072
      %1074 = vdwg.mxu0
      %v1075 = vld [vmem:[%s2] sm:$0x1]
      %v1077 = vperm.slane %v1075, 0
      %v1079 = vmul.f32 %v916, %v1077
      %v1080 = vmul.f32 %v918, %v1077
      %v1081 = vmul.f32 %v921, %v1077
      %v1082 = vmul.f32 %v923, %v1077
      %v1083 = vmul.f32 %v926, %v1077
      %v1084 = vmul.f32 %v928, %v1077
      %v1085 = vmul.f32 %v931, %v1077
      %v1086 = vmul.f32 %v933, %v1077
      %v1087 = vmul.f32 %v936, %v1077
      %v1088 = vmul.f32 %v938, %v1077
      %v1089 = vmul.f32 %v941, %v1077
      %v1090 = vmul.f32 %v943, %v1077
      %v1091 = vmul.f32 %v946, %v1077
      %v1092 = vmul.f32 %v948, %v1077
      %v1093 = vmul.f32 %v951, %v1077
      %v1094 = vmul.f32 %v953, %v1077
      %v1095 = vmul.f32 %v956, %v1077
      %v1096 = vmul.f32 %v958, %v1077
      %v1097 = vmul.f32 %v961, %v1077
      %v1098 = vmul.f32 %v963, %v1077
      %v1099 = vmul.f32 %v966, %v1077
      %v1100 = vmul.f32 %v968, %v1077
      %v1101 = vmul.f32 %v971, %v1077
      %v1102 = vmul.f32 %v973, %v1077
      %v1103 = vmul.f32 %v976, %v1077
      %v1104 = vmul.f32 %v978, %v1077
      %v1105 = vmul.f32 %v981, %v1077
      %v1106 = vmul.f32 %v983, %v1077
      %v1107 = vmul.f32 %v986, %v1077
      %v1108 = vmul.f32 %v988, %v1077
      %v1109 = vmul.f32 %v991, %v1077
      %v1110 = vmul.f32 %v993, %v1077
      %v1111 = vmul.f32 %v996, %v1077
      %v1112 = vmul.f32 %v998, %v1077
      %v1113 = vmul.f32 %v1001, %v1077
      %v1114 = vmul.f32 %v1003, %v1077
      %v1115 = vmul.f32 %v1006, %v1077
      %v1116 = vmul.f32 %v1008, %v1077
      %v1117 = vmul.f32 %v1011, %v1077
      %v1118 = vmul.f32 %v1013, %v1077
      %v1119 = vmul.f32 %v1016, %v1077
      %v1120 = vmul.f32 %v1018, %v1077
      %v1121 = vmul.f32 %v1021, %v1077
      %v1122 = vmul.f32 %v1023, %v1077
      %v1123 = vmul.f32 %v1026, %v1077
      %v1124 = vmul.f32 %v1028, %v1077
      %v1125 = vmul.f32 %v1031, %v1077
      %v1126 = vmul.f32 %v1033, %v1077
      %v1127 = vmul.f32 %v1036, %v1077
      %v1128 = vmul.f32 %v1038, %v1077
      %v1129 = vmul.f32 %v1041, %v1077
      %v1130 = vmul.f32 %v1043, %v1077
      %v1131 = vmul.f32 %v1046, %v1077
      %v1132 = vmul.f32 %v1048, %v1077
      %v1133 = vmul.f32 %v1051, %v1077
      %v1134 = vmul.f32 %v1053, %v1077
      %v1135 = vmul.f32 %v1056, %v1077
      %v1136 = vmul.f32 %v1058, %v1077
      %v1137 = vmul.f32 %v1061, %v1077
      %v1138 = vmul.f32 %v1063, %v1077
      %v1139 = vmul.f32 %v1066, %v1077
      %v1140 = vmul.f32 %v1068, %v1077
      %v1141 = vmul.f32 %v1071, %v1077
      %v1142 = vmul.f32 %v1073, %v1077
      %v1143 = vld [vmem:[%s3] sm:$0x1]
      %v1145 = vperm.slane %v1143, 0
      %v1147 = vadd.f32 %v1079, %v1145
      %v1148 = vadd.f32 %v1080, %v1145
      %v1149 = vadd.f32 %v1081, %v1145
      %v1150 = vadd.f32 %v1082, %v1145
      %v1151 = vadd.f32 %v1083, %v1145
      %v1152 = vadd.f32 %v1084, %v1145
      %v1153 = vadd.f32 %v1085, %v1145
      %v1154 = vadd.f32 %v1086, %v1145
      %v1155 = vadd.f32 %v1087, %v1145
      %v1156 = vadd.f32 %v1088, %v1145
      %v1157 = vadd.f32 %v1089, %v1145
      %v1158 = vadd.f32 %v1090, %v1145
      %v1159 = vadd.f32 %v1091, %v1145
      %v1160 = vadd.f32 %v1092, %v1145
      %v1161 = vadd.f32 %v1093, %v1145
      %v1162 = vadd.f32 %v1094, %v1145
      %v1163 = vadd.f32 %v1095, %v1145
      %v1164 = vadd.f32 %v1096, %v1145
      %v1165 = vadd.f32 %v1097, %v1145
      %v1166 = vadd.f32 %v1098, %v1145
      %v1167 = vadd.f32 %v1099, %v1145
      %v1168 = vadd.f32 %v1100, %v1145
      %v1169 = vadd.f32 %v1101, %v1145
      %v1170 = vadd.f32 %v1102, %v1145
      %v1171 = vadd.f32 %v1103, %v1145
      %v1172 = vadd.f32 %v1104, %v1145
      %v1173 = vadd.f32 %v1105, %v1145
      %v1174 = vadd.f32 %v1106, %v1145
      %v1175 = vadd.f32 %v1107, %v1145
      %v1176 = vadd.f32 %v1108, %v1145
      %v1177 = vadd.f32 %v1109, %v1145
      %v1178 = vadd.f32 %v1110, %v1145
      %v1179 = vadd.f32 %v1111, %v1145
      %v1180 = vadd.f32 %v1112, %v1145
      %v1181 = vadd.f32 %v1113, %v1145
      %v1182 = vadd.f32 %v1114, %v1145
      %v1183 = vadd.f32 %v1115, %v1145
      %v1184 = vadd.f32 %v1116, %v1145
      %v1185 = vadd.f32 %v1117, %v1145
      %v1186 = vadd.f32 %v1118, %v1145
      %v1187 = vadd.f32 %v1119, %v1145
      %v1188 = vadd.f32 %v1120, %v1145
      %v1189 = vadd.f32 %v1121, %v1145
      %v1190 = vadd.f32 %v1122, %v1145
      %v1191 = vadd.f32 %v1123, %v1145
      %v1192 = vadd.f32 %v1124, %v1145
      %v1193 = vadd.f32 %v1125, %v1145
      %v1194 = vadd.f32 %v1126, %v1145
      %v1195 = vadd.f32 %v1127, %v1145
      %v1196 = vadd.f32 %v1128, %v1145
      %v1197 = vadd.f32 %v1129, %v1145
      %v1198 = vadd.f32 %v1130, %v1145
      %v1199 = vadd.f32 %v1131, %v1145
      %v1200 = vadd.f32 %v1132, %v1145
      %v1201 = vadd.f32 %v1133, %v1145
      %v1202 = vadd.f32 %v1134, %v1145
      %v1203 = vadd.f32 %v1135, %v1145
      %v1204 = vadd.f32 %v1136, %v1145
      %v1205 = vadd.f32 %v1137, %v1145
      %v1206 = vadd.f32 %v1138, %v1145
      %v1207 = vadd.f32 %v1139, %v1145
      %v1208 = vadd.f32 %v1140, %v1145
      %v1209 = vadd.f32 %v1141, %v1145
      %v1210 = vadd.f32 %v1142, %v1145
      %v1211 = vmax.f32 %v1147, 0.0
      %v1212 = vmax.f32 %v1148, 0.0
      %v1213 = vmax.f32 %v1149, 0.0
      %v1214 = vmax.f32 %v1150, 0.0
      %v1215 = vmax.f32 %v1151, 0.0
      %v1216 = vmax.f32 %v1152, 0.0
      %v1217 = vmax.f32 %v1153, 0.0
      %v1218 = vmax.f32 %v1154, 0.0
      %v1219 = vmax.f32 %v1155, 0.0
      %v1220 = vmax.f32 %v1156, 0.0
      %v1221 = vmax.f32 %v1157, 0.0
      %v1222 = vmax.f32 %v1158, 0.0
      %v1223 = vmax.f32 %v1159, 0.0
      %v1224 = vmax.f32 %v1160, 0.0
      %v1225 = vmax.f32 %v1161, 0.0
      %v1226 = vmax.f32 %v1162, 0.0
      %v1227 = vmax.f32 %v1163, 0.0
      %v1228 = vmax.f32 %v1164, 0.0
      %v1229 = vmax.f32 %v1165, 0.0
      %v1230 = vmax.f32 %v1166, 0.0
      %v1231 = vmax.f32 %v1167, 0.0
      %v1232 = vmax.f32 %v1168, 0.0
      %v1233 = vmax.f32 %v1169, 0.0
      %v1234 = vmax.f32 %v1170, 0.0
      %v1235 = vmax.f32 %v1171, 0.0
      %v1236 = vmax.f32 %v1172, 0.0
      %v1237 = vmax.f32 %v1173, 0.0
      %v1238 = vmax.f32 %v1174, 0.0
      %v1239 = vmax.f32 %v1175, 0.0
      %v1240 = vmax.f32 %v1176, 0.0
      %v1241 = vmax.f32 %v1177, 0.0
      %v1242 = vmax.f32 %v1178, 0.0
      %v1243 = vmax.f32 %v1179, 0.0
      %v1244 = vmax.f32 %v1180, 0.0
      %v1245 = vmax.f32 %v1181, 0.0
      %v1246 = vmax.f32 %v1182, 0.0
      %v1247 = vmax.f32 %v1183, 0.0
      %v1248 = vmax.f32 %v1184, 0.0
      %v1249 = vmax.f32 %v1185, 0.0
      %v1250 = vmax.f32 %v1186, 0.0
      %v1251 = vmax.f32 %v1187, 0.0
      %v1252 = vmax.f32 %v1188, 0.0
      %v1253 = vmax.f32 %v1189, 0.0
      %v1254 = vmax.f32 %v1190, 0.0
      %v1255 = vmax.f32 %v1191, 0.0
      %v1256 = vmax.f32 %v1192, 0.0
      %v1257 = vmax.f32 %v1193, 0.0
      %v1258 = vmax.f32 %v1194, 0.0
      %v1259 = vmax.f32 %v1195, 0.0
      %v1260 = vmax.f32 %v1196, 0.0
      %v1261 = vmax.f32 %v1197, 0.0
      %v1262 = vmax.f32 %v1198, 0.0
      %v1263 = vmax.f32 %v1199, 0.0
      %v1264 = vmax.f32 %v1200, 0.0
      %v1265 = vmax.f32 %v1201, 0.0
      %v1266 = vmax.f32 %v1202, 0.0
      %v1267 = vmax.f32 %v1203, 0.0
      %v1268 = vmax.f32 %v1204, 0.0
      %v1269 = vmax.f32 %v1205, 0.0
      %v1270 = vmax.f32 %v1206, 0.0
      %v1271 = vmax.f32 %v1207, 0.0
      %v1272 = vmax.f32 %v1208, 0.0
      %v1273 = vmax.f32 %v1209, 0.0
      %v1274 = vmax.f32 %v1210, 0.0
      %vm1275 = vcmask 261120
      %1276 = vst.msk [vmem:[%s202] sm:$0xff] %vm1275, %v1211
      %1277 = vst.msk [vmem:[%s202 + $0x8] sm:$0xff] %vm1275, %v1212
      %1278 = vst.msk [vmem:[%s202 + $0x10] sm:$0xff] %vm1275, %v1213
      %1279 = vst.msk [vmem:[%s202 + $0x18] sm:$0xff] %vm1275, %v1214
      %1280 = vst.msk [vmem:[%s202 + $0x20] sm:$0xff] %vm1275, %v1215
      %1281 = vst.msk [vmem:[%s202 + $0x28] sm:$0xff] %vm1275, %v1216
      %1282 = vst.msk [vmem:[%s202 + $0x30] sm:$0xff] %vm1275, %v1217
      %1283 = vst.msk [vmem:[%s202 + $0x38] sm:$0xff] %vm1275, %v1218
      %1284 = vst.msk [vmem:[%s202 + $0x40] sm:$0xff] %vm1275, %v1219
      %1285 = vst.msk [vmem:[%s202 + $0x48] sm:$0xff] %vm1275, %v1220
      %1286 = vst.msk [vmem:[%s202 + $0x50] sm:$0xff] %vm1275, %v1221
      %1287 = vst.msk [vmem:[%s202 + $0x58] sm:$0xff] %vm1275, %v1222
      %1288 = vst.msk [vmem:[%s202 + $0x60] sm:$0xff] %vm1275, %v1223
      %1289 = vst.msk [vmem:[%s202 + $0x68] sm:$0xff] %vm1275, %v1224
      %1290 = vst.msk [vmem:[%s202 + $0x70] sm:$0xff] %vm1275, %v1225
      %1291 = vst.msk [vmem:[%s202 + $0x78] sm:$0xff] %vm1275, %v1226
      %1292 = vst.msk [vmem:[%s202 + $0x80] sm:$0xff] %vm1275, %v1227
      %1293 = vst.msk [vmem:[%s202 + $0x88] sm:$0xff] %vm1275, %v1228
      %1294 = vst.msk [vmem:[%s202 + $0x90] sm:$0xff] %vm1275, %v1229
      %1295 = vst.msk [vmem:[%s202 + $0x98] sm:$0xff] %vm1275, %v1230
      %1296 = vst.msk [vmem:[%s202 + $0xa0] sm:$0xff] %vm1275, %v1231
      %1297 = vst.msk [vmem:[%s202 + $0xa8] sm:$0xff] %vm1275, %v1232
      %1298 = vst.msk [vmem:[%s202 + $0xb0] sm:$0xff] %vm1275, %v1233
      %1299 = vst.msk [vmem:[%s202 + $0xb8] sm:$0xff] %vm1275, %v1234
      %1300 = vst.msk [vmem:[%s202 + $0xc0] sm:$0xff] %vm1275, %v1235
      %1301 = vst.msk [vmem:[%s202 + $0xc8] sm:$0xff] %vm1275, %v1236
      %1302 = vst.msk [vmem:[%s202 + $0xd0] sm:$0xff] %vm1275, %v1237
      %1303 = vst.msk [vmem:[%s202 + $0xd8] sm:$0xff] %vm1275, %v1238
      %1304 = vst.msk [vmem:[%s202 + $0xe0] sm:$0xff] %vm1275, %v1239
      %1305 = vst.msk [vmem:[%s202 + $0xe8] sm:$0xff] %vm1275, %v1240
      %1306 = vst.msk [vmem:[%s202 + $0xf0] sm:$0xff] %vm1275, %v1241
      %1307 = vst.msk [vmem:[%s202 + $0xf8] sm:$0xff] %vm1275, %v1242
      %1308 = vst.msk [vmem:[%s202 + $0x100] sm:$0xff] %vm1275, %v1243
      %1309 = vst.msk [vmem:[%s202 + $0x108] sm:$0xff] %vm1275, %v1244
      %1310 = vst.msk [vmem:[%s202 + $0x110] sm:$0xff] %vm1275, %v1245
      %1311 = vst.msk [vmem:[%s202 + $0x118] sm:$0xff] %vm1275, %v1246
      %1312 = vst.msk [vmem:[%s202 + $0x120] sm:$0xff] %vm1275, %v1247
      %1313 = vst.msk [vmem:[%s202 + $0x128] sm:$0xff] %vm1275, %v1248
      %1314 = vst.msk [vmem:[%s202 + $0x130] sm:$0xff] %vm1275, %v1249
      %1315 = vst.msk [vmem:[%s202 + $0x138] sm:$0xff] %vm1275, %v1250
      %1316 = vst.msk [vmem:[%s202 + $0x140] sm:$0xff] %vm1275, %v1251
      %1317 = vst.msk [vmem:[%s202 + $0x148] sm:$0xff] %vm1275, %v1252
      %1318 = vst.msk [vmem:[%s202 + $0x150] sm:$0xff] %vm1275, %v1253
      %1319 = vst.msk [vmem:[%s202 + $0x158] sm:$0xff] %vm1275, %v1254
      %1320 = vst.msk [vmem:[%s202 + $0x160] sm:$0xff] %vm1275, %v1255
      %1321 = vst.msk [vmem:[%s202 + $0x168] sm:$0xff] %vm1275, %v1256
      %1322 = vst.msk [vmem:[%s202 + $0x170] sm:$0xff] %vm1275, %v1257
      %1323 = vst.msk [vmem:[%s202 + $0x178] sm:$0xff] %vm1275, %v1258
      %1324 = vst.msk [vmem:[%s202 + $0x180] sm:$0xff] %vm1275, %v1259
      %1325 = vst.msk [vmem:[%s202 + $0x188] sm:$0xff] %vm1275, %v1260
      %1326 = vst.msk [vmem:[%s202 + $0x190] sm:$0xff] %vm1275, %v1261
      %1327 = vst.msk [vmem:[%s202 + $0x198] sm:$0xff] %vm1275, %v1262
      %1328 = vst.msk [vmem:[%s202 + $0x1a0] sm:$0xff] %vm1275, %v1263
      %1329 = vst.msk [vmem:[%s202 + $0x1a8] sm:$0xff] %vm1275, %v1264
      %1330 = vst.msk [vmem:[%s202 + $0x1b0] sm:$0xff] %vm1275, %v1265
      %1331 = vst.msk [vmem:[%s202 + $0x1b8] sm:$0xff] %vm1275, %v1266
      %1332 = vst.msk [vmem:[%s202 + $0x1c0] sm:$0xff] %vm1275, %v1267
      %1333 = vst.msk [vmem:[%s202 + $0x1c8] sm:$0xff] %vm1275, %v1268
      %1334 = vst.msk [vmem:[%s202 + $0x1d0] sm:$0xff] %vm1275, %v1269
      %1335 = vst.msk [vmem:[%s202 + $0x1d8] sm:$0xff] %vm1275, %v1270
      %1336 = vst.msk [vmem:[%s202 + $0x1e0] sm:$0xff] %vm1275, %v1271
      %1337 = vst.msk [vmem:[%s202 + $0x1e8] sm:$0xff] %vm1275, %v1272
      %1338 = vst.msk [vmem:[%s202 + $0x1f0] sm:$0xff] %vm1275, %v1273
      %1339 = vst.msk [vmem:[%s202 + $0x1f8] sm:$0xff] %vm1275, %v1274
      %s1340 = smul.u32 64, %s15
      %p1341 = scmp.lt.s32.totalorder %s1340, 255
      %s1342 = scalar_select %p1341, %s1340, 255
      %s1343 = smul.addr %s1342, 8
      %s1344 = scalar_lea.vmem %s4, %s1343
      // Predicated region
      $region37: #{tpu_custom_call.1} parent=35 // pred_check
        %p1345 = pneg %p122
      $region38: #{tpu_custom_call.1} parent=35 // pred_check_branch
        %1347 = sbr.rel (%p1345) target = $region40
      $region39: #{tpu_custom_call.1} parent=35 // pred_region
        %s1348 = smul.u32 64, %s15
      $region40: #{tpu_custom_call.1} parent=35 // pred_fallthru
        _
    $region36: #{tpu_custom_call.1} parent=5 // pred_fallthru
      _
    %p1349 = scmp.le.s32.totalorder 2, %s10
    // Predicated region
    $region41: #{tpu_custom_call.1} parent=5 // pred_check
      %p1350 = pneg %p1349
    $region42: #{tpu_custom_call.1} parent=5 // pred_check_branch
      %1352 = sbr.rel (%p1350) target = $region44
    $region43: #{tpu_custom_call.1} parent=5 // pred_region
      %s1353 = ssub.s32 %s10, 2
      // Predicated region
      $region45: #{tpu_custom_call.1} parent=43 // pred_check
        %p1354 = pneg %p128
      $region46: #{tpu_custom_call.1} parent=43 // pred_check_branch
        %1356 = sbr.rel (%p1354) target = $region48
      $region47: #{tpu_custom_call.1} parent=43 // pred_region
        %s1357 = smul.u32 64, %s16
        %p1358 = scmp.lt.s32.totalorder %s1357, 255
        %s1359 = scalar_select %p1358, %s1357, 255
        %s1360 = smul.addr %s1359, 8
        %s1361 = scalar_lea.vmem %s4, %s1360
      $region48: #{tpu_custom_call.1} parent=43 // pred_fallthru
        _
    $region44: #{tpu_custom_call.1} parent=5 // pred_fallthru
      _
  $region6: #{tpu_custom_call.1} parent=0 // loop_footer
    %s14 = sadd.s32 1, %s10
  $region7: #{tpu_custom_call.1} parent=0 // loop_footer_branch
    %9 = sbr.rel target = $region3
  $region8: #{tpu_custom_call.1} parent=0 // loop_exit
    _

</llo_original>
